<compile_context>
chip_gen: v6e
topology: v6e:2x2x1
jax: 0.10.0
libtpu: 0.0.40
codegen_flags: <defaults>
</compile_context>

<pallas_src>
import math
from functools import partial

import jax
import jax.numpy as jnp
from jax import lax
from jax.experimental import pallas as pl
from jax.experimental.pallas import tpu as pltpu


# ----------------------------------------------------------------------------
# Tiling helpers
# ----------------------------------------------------------------------------
def _pick_tile(dim, target, step=128):
    """Largest multiple of `step` <= target dividing dim, else the full dim.
    Guarantees blocks are (8,128)-aligned or equal to the full dim."""
    if dim <= target:
        return dim
    t = (target // step) * step
    while t >= step:
        if dim % t == 0:
            return t
        t -= step
    return dim


def _head_group(n_heads, e, d):
    """Smallest head-group size g dividing n_heads whose per-group widths g*e
    and g*d are lane-aligned (multiples of 128); falls back to all heads
    (full-dim blocks) when no such group exists."""
    for g in range(1, n_heads):
        if n_heads % g == 0 and (g * e) % 128 == 0 and (g * d) % 128 == 0:
            return g
    return n_heads


# ----------------------------------------------------------------------------
# Tiled linear:  y = x @ w + b      (w stored pre-transposed as (d_in, d_out))
# ----------------------------------------------------------------------------
def _linear_kernel(x_ref, w_ref, b_ref, o_ref, acc_ref):
    k = pl.program_id(2)

    @pl.when(k == 0)
    def _():
        acc_ref[...] = jnp.zeros_like(acc_ref)

    acc_ref[...] += jnp.dot(x_ref[...], w_ref[...],
                            preferred_element_type=jnp.float32)

    @pl.when(k == pl.num_programs(2) - 1)
    def _():
        o_ref[...] = (acc_ref[...] + b_ref[...]).astype(o_ref.dtype)


def pallas_linear(x, w, b, *, tm=512, tn=256, tk=512):
    """x: (N, d_in); w: (d_in, d_out); b: (d_out,)."""
    N, d_in = x.shape
    d_out = w.shape[1]
    tm = _pick_tile(N, tm)
    tn = _pick_tile(d_out, tn)
    tk = _pick_tile(d_in, tk)
    b2 = b.reshape(1, d_out)
    return pl.pallas_call(
        _linear_kernel,
        out_shape=jax.ShapeDtypeStruct((N, d_out), x.dtype),
        grid_spec=pltpu.PrefetchScalarGridSpec(
            num_scalar_prefetch=0,
            grid=(N // tm, d_out // tn, d_in // tk),
            in_specs=[
                pl.BlockSpec((tm, tk), lambda i, j, k: (i, k)),
                pl.BlockSpec((tk, tn), lambda i, j, k: (k, j)),
                pl.BlockSpec((1, tn), lambda i, j, k: (0, j)),
            ],
            out_specs=pl.BlockSpec((tm, tn), lambda i, j, k: (i, j)),
            scratch_shapes=[pltpu.VMEM((tm, tn), jnp.float32)],
        ),
        compiler_params=pltpu.CompilerParams(
            dimension_semantics=("parallel", "parallel", "arbitrary")),
    )(x, w, b2)


# ----------------------------------------------------------------------------
# Flash-style multi-head attention (no attention-matrix output).
# Grid = (B, head_group, L/tl, S/ts).  Each grid step processes G heads whose
# column block is lane-aligned (G*E multiple of 128, or the full width).
# ----------------------------------------------------------------------------
def _flash_kernel(q_ref, k_ref, v_ref, o_ref, m_sc, l_sc, acc_sc, *, G, E, D):
    kv = pl.program_id(3)

    @pl.when(kv == 0)
    def _():
        m_sc[...] = jnp.full_like(m_sc, -jnp.inf)
        l_sc[...] = jnp.zeros_like(l_sc)
        acc_sc[...] = jnp.zeros_like(acc_sc)

    # 1/sqrt(d_k) is already folded into the Q projection weights.
    for g in range(G):
        qh = q_ref[0, :, g * E:(g + 1) * E]          # (tl, E)
        kh = k_ref[0, :, g * E:(g + 1) * E]          # (ts, E)
        vh = v_ref[0, :, g * D:(g + 1) * D]          # (ts, D)

        # Q.K^T contracting the last dims (no transpose of the K tile).
        s = lax.dot_general(qh, kh, (((1,), (1,)), ((), ())),
                            preferred_element_type=jnp.float32)   # (tl, ts)

        m_prev = m_sc[g]                              # (tl, 1)
        m_new = jnp.maximum(m_prev, jnp.max(s, axis=-1, keepdims=True))
        alpha = jnp.exp(m_prev - m_new)
        p = jnp.exp(s - m_new)
        l_sc[g] = alpha * l_sc[g] + jnp.sum(p, axis=-1, keepdims=True)
        acc_sc[g] = alpha * acc_sc[g] + jnp.dot(
            p.astype(vh.dtype), vh, preferred_element_type=jnp.float32)
        m_sc[g] = m_new

    @pl.when(kv == pl.num_programs(3) - 1)
    def _():
        # Assemble the full (tl, G*D) context row and store once (lane-dense,
        # unmasked vst) instead of G partial-lane stores.
        ctx = [acc_sc[g] * pl.reciprocal(l_sc[g], approx=True) for g in range(G)]
        o_ref[0] = jnp.concatenate(ctx, axis=-1).astype(o_ref.dtype)


def _flash_call(args, in_specs, *, B, L, S, HD, G, E, D, n_groups, tl, ts,
                out_dtype):
    return pl.pallas_call(
        partial(_flash_kernel, G=G, E=E, D=D),
        out_shape=jax.ShapeDtypeStruct((B, L, HD), out_dtype),
        grid_spec=pltpu.PrefetchScalarGridSpec(
            num_scalar_prefetch=0,
            grid=(B, n_groups, L // tl, S // ts),
            in_specs=in_specs,
            out_specs=pl.BlockSpec((1, tl, G * D),
                                   lambda b, hp, ql, kv: (b, ql, hp)),
            scratch_shapes=[
                pltpu.VMEM((G, tl, 1), jnp.float32),   # running max m
                pltpu.VMEM((G, tl, 1), jnp.float32),   # running sum l
                pltpu.VMEM((G, tl, D), jnp.float32),   # context accumulator
            ],
        ),
        compiler_params=pltpu.CompilerParams(
            dimension_semantics=("parallel", "parallel", "parallel",
                                 "arbitrary")),
    )(*args)


def pallas_flash_mha(q, k, v, n_heads, *, tl=256, ts=512):
    """q: (B,L,H*E), k: (B,S,H*E), v: (B,S,H*D) -> (B,L,H*D)."""
    B, L, HE = q.shape
    S = k.shape[1]
    HD = v.shape[2]
    H = n_heads
    E = HE // H
    D = HD // H
    G = _head_group(H, E, D)
    n_groups = H // G
    tl = _pick_tile(L, tl)
    ts = _pick_tile(S, ts)
    in_specs = [
        pl.BlockSpec((1, tl, G * E), lambda b, hp, ql, kv: (b, ql, hp)),
        pl.BlockSpec((1, ts, G * E), lambda b, hp, ql, kv: (b, kv, hp)),
        pl.BlockSpec((1, ts, G * D), lambda b, hp, ql, kv: (b, kv, hp)),
    ]
    return _flash_call((q, k, v), in_specs, B=B, L=L, S=S, HD=HD, G=G, E=E,
                       D=D, n_groups=n_groups, tl=tl, ts=ts, out_dtype=q.dtype)


def pallas_flash_mha_qkv(qkv, n_heads, d_k, d_v, *, tl=256, ts=512):
    """Self-attention reading a fused projection qkv: (B, L, [Q|K|V] columns).

    The Q/K/V column sections are selected with BlockSpec index_maps over the
    SAME HBM array (passed three times), so no sliced copies of the activation
    are materialized.  Requires d_k == d_v and a lane-aligned head group
    (checked by the caller)."""
    B, L, _ = qkv.shape
    H = n_heads
    E = d_k
    D = d_v
    HD = H * D
    G = _head_group(H, E, D)
    n_groups = H // G
    tl = _pick_tile(L, tl)
    ts = _pick_tile(L, ts)
    in_specs = [
        pl.BlockSpec((1, tl, G * E),
                     lambda b, hp, ql, kv: (b, ql, hp)),
        pl.BlockSpec((1, ts, G * E),
                     lambda b, hp, ql, kv, ng=n_groups: (b, kv, ng + hp)),
        pl.BlockSpec((1, ts, G * D),
                     lambda b, hp, ql, kv, ng=n_groups: (b, kv, 2 * ng + hp)),
    ]
    return _flash_call((qkv, qkv, qkv), in_specs, B=B, L=L, S=L, HD=HD, G=G,
                       E=E, D=D, n_groups=n_groups, tl=tl, ts=ts,
                       out_dtype=qkv.dtype)


# ----------------------------------------------------------------------------
# Full attention with attention-matrix output (only when output_attention=True).
# Tiled over (B, L/tl); exact softmax normalization so returned rows sum to 1.
# ----------------------------------------------------------------------------
def _mha_full_kernel(q_ref, k_ref, v_ref, o_ref, a_ref, *, H, E, D):
    ctx = []
    for h in range(H):
        qh = q_ref[0, :, h * E:(h + 1) * E]          # (tl, E) -- already scaled
        kh = k_ref[0, :, h * E:(h + 1) * E]          # (S, E)
        vh = v_ref[0, :, h * D:(h + 1) * D]          # (S, D)
        s = lax.dot_general(qh, kh, (((1,), (1,)), ((), ())),
                            preferred_element_type=jnp.float32)   # (tl, S)
        m = jnp.max(s, axis=-1, keepdims=True)
        p = jnp.exp(s - m)
        attn = p / jnp.sum(p, axis=-1, keepdims=True)
        ctx.append(jnp.dot(attn.astype(vh.dtype), vh,
                           preferred_element_type=jnp.float32))
        a_ref[0, h] = attn.astype(a_ref.dtype)
    # Single lane-dense (tl, H*D) context store.
    o_ref[0] = jnp.concatenate(ctx, axis=-1).astype(o_ref.dtype)


def pallas_full_mha_with_attn(q, k, v, n_heads, *, tl=128):
    """Returns (ctx (B,L,H*D), attn (B,H,L,S))."""
    B, L, HE = q.shape
    S = k.shape[1]
    HD = v.shape[2]
    H = n_heads
    E = HE // H
    D = HD // H
    tl = _pick_tile(L, tl)
    return pl.pallas_call(
        partial(_mha_full_kernel, H=H, E=E, D=D),
        out_shape=(
            jax.ShapeDtypeStruct((B, L, HD), q.dtype),
            jax.ShapeDtypeStruct((B, H, L, S), jnp.float32),
        ),
        grid=(B, L // tl),
        in_specs=[
            pl.BlockSpec((1, tl, HE), lambda b, ql: (b, ql, 0)),
            pl.BlockSpec((1, S, HE), lambda b, ql: (b, 0, 0)),
            pl.BlockSpec((1, S, HD), lambda b, ql: (b, 0, 0)),
        ],
        out_specs=(
            pl.BlockSpec((1, tl, HD), lambda b, ql: (b, ql, 0)),
            pl.BlockSpec((1, H, tl, S), lambda b, ql: (b, 0, ql, 0)),
        ),
        compiler_params=pltpu.CompilerParams(
            dimension_semantics=("parallel", "parallel")),
    )(q, k, v)


# ----------------------------------------------------------------------------
# AttentionLayer forward (glue in plain JAX, hot paths in Pallas)
# ----------------------------------------------------------------------------
def attention_layer_forward(params, queries, keys, values, n_heads,
                            attn_mask=None, tau=None, delta=None,
                            output_attention=False, self_attention=None):
    # TODO(synk): attn_mask (TriangularCausalMask) not implemented (mask_flag=False path).
    del attn_mask, tau, delta
    B, L, d_model = queries.shape
    _, S, _ = keys.shape
    H = n_heads
    d_k = params["wq"].shape[1] // H
    d_v = params["wv"].shape[1] // H

    if self_attention is None:
        # Object identity only works outside jit; pass self_attention=True
        # explicitly from jitted code to enable the fused QKV projection.
        self_attention = queries is keys and keys is values

    if self_attention and d_k == d_v:
        HE = H * d_k
        # Fused Q/K/V projection: a single pass over the activations.
        qkv = pallas_linear(queries.reshape(B * L, d_model),
                            params["w_qkv"], params["b_qkv"])
        G = _head_group(H, d_k, d_v)
        if not output_attention and (G * d_k) % 128 == 0:
            # Lane-aligned head groups: read the fused activation in place
            # (no HBM slice copies of Q/K/V).
            ctx = pallas_flash_mha_qkv(qkv.reshape(B, L, 3 * HE), H, d_k, d_v)
            out = pallas_linear(ctx.reshape(B * L, H * d_v),
                                params["wo"], params["bo"])
            return out.reshape(B, L, d_model), None
        q = qkv[:, :HE].reshape(B, L, HE)
        k = qkv[:, HE:2 * HE].reshape(B, S, HE)
        v = qkv[:, 2 * HE:].reshape(B, S, H * d_v)
    else:
        q = pallas_linear(queries.reshape(B * L, d_model),
                          params["wq_s"], params["bq_s"]).reshape(B, L, H * d_k)
        k = pallas_linear(keys.reshape(B * S, d_model),
                          params["wk"], params["bk"]).reshape(B, S, H * d_k)
        v = pallas_linear(values.reshape(B * S, d_model),
                          params["wv"], params["bv"]).reshape(B, S, H * d_v)

    if output_attention:
        ctx, attn = pallas_full_mha_with_attn(q, k, v, H)
    else:
        ctx = pallas_flash_mha(q, k, v, H)
        attn = None

    out = pallas_linear(ctx.reshape(B * L, H * d_v), params["wo"], params["bo"])
    return out.reshape(B, L, d_model), attn


# ----------------------------------------------------------------------------
# Deterministic parameter init (PyTorch nn.Linear-like uniform).  Weights are
# stored pre-transposed (d_in, d_out); the attention scale 1/sqrt(d_k) is
# folded into the Q projection (wq_s and the Q section of w_qkv).
# ----------------------------------------------------------------------------
def init_params(key, d_model, n_heads, d_keys=None, d_values=None):
    d_keys = d_keys or d_model // n_heads
    d_values = d_values or d_model // n_heads
    ks = jax.random.split(key, 8)

    def lin(kw, kb, d_in, d_out):
        bound = 1.0 / math.sqrt(d_in)
        w = jax.random.uniform(kw, (d_in, d_out), jnp.float32, -bound, bound)
        b = jax.random.uniform(kb, (d_out,), jnp.float32, -bound, bound)
        return w, b

    wq, bq = lin(ks[0], ks[1], d_model, d_keys * n_heads)
    wk, bk = lin(ks[2], ks[3], d_model, d_keys * n_heads)
    wv, bv = lin(ks[4], ks[5], d_model, d_values * n_heads)
    wo, bo = lin(ks[6], ks[7], d_values * n_heads, d_model)

    scale = 1.0 / math.sqrt(d_keys)
    wq_s, bq_s = wq * scale, bq * scale
    w_qkv = jnp.concatenate([wq_s, wk, wv], axis=1)
    b_qkv = jnp.concatenate([bq_s, bk, bv], axis=0)
    return dict(wq=wq, bq=bq, wk=wk, bk=bk, wv=wv, bv=bv, wo=wo, bo=bo,
                wq_s=wq_s, bq_s=bq_s, w_qkv=w_qkv, b_qkv=b_qkv)


# ----------------------------------------------------------------------------
# Pure-JAX reference (same math) for verification
# ----------------------------------------------------------------------------
def reference_forward(params, queries, keys, values, n_heads):
    B, L, d_model = queries.shape
    _, S, _ = keys.shape
    H = n_heads
    d_k = params["wq"].shape[1] // H
    d_v = params["wv"].shape[1] // H
    q = (queries @ params["wq"] + params["bq"]).reshape(B, L, H, d_k)
    k = (keys @ params["wk"] + params["bk"]).reshape(B, S, H, d_k)
    v = (values @ params["wv"] + params["bv"]).reshape(B, S, H, d_v)
    scale = 1.0 / math.sqrt(d_k)
    scores = jnp.einsum("blhe,bshe->bhls", q, k) * scale
    attn = jax.nn.softmax(scores, axis=-1)
    ctx = jnp.einsum("bhls,bshd->blhd", attn, v)
    out = ctx.reshape(B, L, H * d_v) @ params["wo"] + params["bo"]
    return out, attn


if __name__ == "__main__":
    key = jax.random.PRNGKey(0)
    kx, kq, kk, kv, kp, kx2, kp2 = jax.random.split(key, 7)

    # --- small shapes, self-attention (tiny head dim -> full-width fallback) ---
    B, L, S, d_model, n_heads = 2, 8, 8, 32, 4
    params = init_params(kp, d_model, n_heads)
    x = jax.random.normal(kx, (B, L, d_model), jnp.float32)
    out_sa, attn_sa = attention_layer_forward(params, x, x, x, n_heads,
                                              self_attention=True)
    out_sa = jax.block_until_ready(out_sa)
    ref_sa, _ = reference_forward(params, x, x, x, n_heads)
    assert out_sa.shape == (B, L, d_model)
    assert attn_sa is None
    assert jnp.allclose(out_sa, ref_sa, atol=2e-3, rtol=2e-3), float(
        jnp.max(jnp.abs(out_sa - ref_sa)))

    # --- cross-attention with attention-matrix output ---
    queries = jax.random.normal(kq, (B, L, d_model), jnp.float32)
    keys_in = jax.random.normal(kk, (B, S, d_model), jnp.float32)
    values_in = jax.random.normal(kv, (B, S, d_model), jnp.float32)
    out_ca, attn_ca = attention_layer_forward(
        params, queries, keys_in, values_in, n_heads, output_attention=True)
    out_ca = jax.block_until_ready(out_ca)
    attn_ca = jax.block_until_ready(attn_ca)
    ref_out, ref_attn = reference_forward(params, queries, keys_in, values_in,
                                          n_heads)
    assert out_ca.shape == (B, L, d_model)
    assert attn_ca.shape == (B, n_heads, L, S)
    assert jnp.allclose(out_ca, ref_out, atol=2e-3, rtol=2e-3), float(
        jnp.max(jnp.abs(out_ca - ref_out)))
    assert jnp.allclose(attn_ca, ref_attn, atol=2e-3, rtol=2e-3), float(
        jnp.max(jnp.abs(attn_ca - ref_attn)))

    # --- lane-aligned heads (E=64 -> head group of 2): fused QKV BlockSpec
    #     path, head-group grid axis, lane-dense 128-wide stores ---
    B2, L2, d_model2, n_heads2 = 1, 128, 256, 4
    params2 = init_params(kp2, d_model2, n_heads2)
    x2 = jax.random.normal(kx2, (B2, L2, d_model2), jnp.float32)
    out2, attn2 = attention_layer_forward(params2, x2, x2, x2, n_heads2,
                                          self_attention=True)
    out2 = jax.block_until_ready(out2)
    ref2, _ = reference_forward(params2, x2, x2, x2, n_heads2)
    assert out2.shape == (B2, L2, d_model2)
    assert attn2 is None
    assert jnp.allclose(out2, ref2, atol=2e-3, rtol=2e-3), float(
        jnp.max(jnp.abs(out2 - ref2)))

    print("KERNEL_OK")
</pallas_src>

<mosaic_0001>
module attributes {stable_mosaic.version = 11 : i64} {
  func.func @_linear_kernel(%arg0: i32, %arg1: i32, %arg2: i32, %arg3: memref<16x32xf32, #tpu.memory_space<vmem>>, %arg4: memref<32x96xf32, #tpu.memory_space<vmem>>, %arg5: memref<1x96xf32, #tpu.memory_space<vmem>>, %arg6: memref<16x96xf32, #tpu.memory_space<vmem>>, %arg7: memref<16x96xf32, #tpu.memory_space<vmem>>) attributes {dimension_semantics = [#tpu.dimension_semantics<parallel>, #tpu.dimension_semantics<parallel>, #tpu.dimension_semantics<arbitrary>], iteration_bounds = array<i64: 1, 1, 1>, scalar_prefetch = 0 : i64, scratch_operands = 1 : i64, tpu.core_type = #tpu.core_type<tc>, window_params = [{transform_indices = @transform_0, window_bounds = array<i64: 16, 32>}, {transform_indices = @transform_1, window_bounds = array<i64: 32, 96>}, {transform_indices = @transform_2, window_bounds = array<i64: 1, 96>}, {transform_indices = @transform_3, window_bounds = array<i64: 16, 96>}]} {
    %c0_i32 = arith.constant 0 : i32
    %0 = arith.cmpi eq, %arg2, %c0_i32 : i32
    %1 = arith.extui %0 : i1 to i32
    %c0_i32_0 = arith.constant 0 : i32
    %2 = arith.cmpi ne, %1, %c0_i32_0 : i32
    scf.if %2 {
      %cst_10 = arith.constant 0.000000e+00 : f32
      %12 = vector.broadcast %cst_10 : f32 to vector<16x96xf32>
      %c0_11 = arith.constant 0 : index
      %c0_12 = arith.constant 0 : index
      %13 = vector.load %arg7[%c0_11, %c0_12] : memref<16x96xf32, #tpu.memory_space<vmem>>, vector<16x96xf32>
      tpu.vector_store %arg7[%c0_11, %c0_12], %12 {strides = array<i32>} : memref<16x96xf32, #tpu.memory_space<vmem>>, vector<16x96xf32>,
    } else {
    }
    %c0 = arith.constant 0 : index
    %c0_1 = arith.constant 0 : index
    %3 = vector.load %arg7[%c0, %c0_1] : memref<16x96xf32, #tpu.memory_space<vmem>>, vector<16x96xf32>
    %c0_2 = arith.constant 0 : index
    %c0_3 = arith.constant 0 : index
    %4 = vector.load %arg3[%c0_2, %c0_3] : memref<16x32xf32, #tpu.memory_space<vmem>>, vector<16x32xf32>
    %c0_4 = arith.constant 0 : index
    %c0_5 = arith.constant 0 : index
    %5 = vector.load %arg4[%c0_4, %c0_5] : memref<32x96xf32, #tpu.memory_space<vmem>>, vector<32x96xf32>
    %cst = arith.constant dense<0.000000e+00> : vector<16x96xf32>
    %6 = tpu.matmul %4, %5, %cst {dimension_numbers = #tpu.dot_dimension_numbers<[1], [0], [0], [1], [0, 0, 1, 1], [], []>} : vector<16x32xf32>, vector<32x96xf32>, vector<16x96xf32> -> vector<16x96xf32>
    %7 = arith.addf %3, %6 : vector<16x96xf32>
    %c0_6 = arith.constant 0 : index
    %c0_7 = arith.constant 0 : index
    %8 = vector.load %arg7[%c0_6, %c0_7] : memref<16x96xf32, #tpu.memory_space<vmem>>, vector<16x96xf32>
    tpu.vector_store %arg7[%c0_6, %c0_7], %7 {strides = array<i32>} : memref<16x96xf32, #tpu.memory_space<vmem>>, vector<16x96xf32>,
    %c0_i32_8 = arith.constant 0 : i32
    %9 = arith.cmpi eq, %arg2, %c0_i32_8 : i32
    %10 = arith.extui %9 : i1 to i32
    %c0_i32_9 = arith.constant 0 : i32
    %11 = arith.cmpi ne, %10, %c0_i32_9 : i32
    scf.if %11 {
      %c0_10 = arith.constant 0 : index
      %c0_11 = arith.constant 0 : index
      %12 = vector.load %arg7[%c0_10, %c0_11] : memref<16x96xf32, #tpu.memory_space<vmem>>, vector<16x96xf32>
      %c0_12 = arith.constant 0 : index
      %c0_13 = arith.constant 0 : index
      %13 = vector.load %arg5[%c0_12, %c0_13] : memref<1x96xf32, #tpu.memory_space<vmem>>, vector<1x96xf32>
      %14 = vector.broadcast %13 : vector<1x96xf32> to vector<16x96xf32>
      %15 = arith.addf %12, %14 : vector<16x96xf32>
      %c0_14 = arith.constant 0 : index
      %c0_15 = arith.constant 0 : index
      %16 = vector.load %arg6[%c0_14, %c0_15] : memref<16x96xf32, #tpu.memory_space<vmem>>, vector<16x96xf32>
      tpu.vector_store %arg6[%c0_14, %c0_15], %15 {strides = array<i32>} : memref<16x96xf32, #tpu.memory_space<vmem>>, vector<16x96xf32>,
    } else {
    }
    return
  }
  func.func @transform_0(%arg0: i32, %arg1: i32, %arg2: i32) -> (i32, i32) {
    %c0_i32 = arith.constant 0 : i32
    return %arg0, %arg2 : i32, i32
  }
  func.func @transform_1(%arg0: i32, %arg1: i32, %arg2: i32) -> (i32, i32) {
    %c0_i32 = arith.constant 0 : i32
    return %arg2, %arg1 : i32, i32
  }
  func.func @transform_2(%arg0: i32, %arg1: i32, %arg2: i32) -> (i32, i32) {
    %c0_i32 = arith.constant 0 : i32
    %c0_i32_0 = arith.constant 0 : i32
    return %c0_i32, %arg1 : i32, i32
  }
  func.func @transform_3(%arg0: i32, %arg1: i32, %arg2: i32) -> (i32, i32) {
    %c0_i32 = arith.constant 0 : i32
    return %arg0, %arg1 : i32, i32
  }
}

</mosaic_0001>

<llo_original>
// kernel: tpu_custom_call.1
$region0: #{tpu_custom_call.1}
  #allocation0 [shape = 'u32[]', space=smem, size = 0x4, offset = 0x4, fixed_abs, tag = 'smem constant byte address 0x4 - core index']
  #allocation1 [shape = 'u32[144,128]{1,0:T(1,128)}', space=vmem, size = 0x12000, scoped, tag = 'internal scratch']
  #allocation2 [shape = 'f32[16,96]{1,0:T(8,128)}', space=vmem, size = 0x2000, scoped, tag = 'scratch operand']
  %s0 = inlined_call_operand.hbm [shape: f32[16,32], index: 0, kind: input, shape index: {}]
  %s1 = inlined_call_operand.hbm [shape: f32[32,96], index: 1, kind: input, shape index: {}]
  %s2 = inlined_call_operand.vmem [shape: f32[1,96], index: 2, kind: input, shape index: {}]
  %s3 = inlined_call_operand.hbm [shape: f32[16,96], index: 3, kind: output, shape index: {}]
  %s4 = sld [smem:[#allocation0]]
  $region38: #{tpu_custom_call.1} parent=0
    _
  %s6 = ssub.s32 1, %s4
  %s7 = scalar_select 0, %s6, %s4
  $region1: #{tpu_custom_call.1} parent=0
    #allocation3 [shape = 'u8[8192]{0}', space=vmem, size = 0x2000, scoped, tag = 'input window, operand 0, single buffered']
    #allocation4 [shape = 's32[1]{0}', space=sflag, size = 0x4, scoped, tag = 'scoped memory for tpu_custom_call.1']
    #allocation5 [shape = 's32[1]{0}', space=sflag, size = 0x4, scoped, tag = 'scoped memory for tpu_custom_call.1']
    #allocation6 [shape = 'u8[16384]{0}', space=vmem, size = 0x4000, scoped, tag = 'input window, operand 1, single buffered']
    #allocation7 [shape = 's32[1]{0}', space=sflag, size = 0x4, scoped, tag = 'scoped memory for tpu_custom_call.1']
    #allocation8 [shape = 'u8[8192]{0}', space=vmem, size = 0x2000, scoped, tag = 'output window, operand 0, single buffered']
    %8 = vsyncpa [#allocation4], 0
    %9 = vsyncpa [#allocation7], 0
    %10 = vsyncpa [#allocation5], 0
    // Predicated region
    $region2: #{tpu_custom_call.1} parent=1 // pred_check
      _
    $region3: #{tpu_custom_call.1} parent=1 // pred_check_branch
      %12 = sbr.rel (0) target = $region5
    $region4: #{tpu_custom_call.1} parent=1 // pred_region
      %s14 = ssub.s32 256, 256
      %15 = vsyncadd [#allocation4], %s14
      %s16 = sshll.u32 [#allocation3], 4
      %s17 = int_to_ptr.vmem [resolvable:$true] %s16
      %22 = dma.hbm_to_vmem [thread:$0]  %s0, 256, %s17, [#allocation4], 128, 128, 8
    $region5: #{tpu_custom_call.1} parent=1 // pred_fallthru
      _
    // Predicated region
    $region6: #{tpu_custom_call.1} parent=1 // pred_check
      _
    $region7: #{tpu_custom_call.1} parent=1 // pred_check_branch
      %24 = sbr.rel (0) target = $region9
    $region8: #{tpu_custom_call.1} parent=1 // pred_region
      %s26 = ssub.s32 512, 512
      %27 = vsyncadd [#allocation7], %s26
      %s28 = sshll.u32 [#allocation6], 4
      %s29 = int_to_ptr.vmem [resolvable:$true] %s28
      %34 = dma.hbm_to_vmem [thread:$0]  %s1, 512, %s29, [#allocation7], 128, 128, 8
    $region9: #{tpu_custom_call.1} parent=1 // pred_fallthru
      _
    // Predicated region
    $region10: #{tpu_custom_call.1} parent=1 // pred_check
      _
    $region11: #{tpu_custom_call.1} parent=1 // pred_check_branch
      %36 = sbr.rel (0) target = $region13
    $region12: #{tpu_custom_call.1} parent=1 // pred_region
      _
    $region13: #{tpu_custom_call.1} parent=1 // pred_fallthru
      _
    // Predicated region
    $region14: #{tpu_custom_call.1} parent=1 // pred_check
      _
    $region15: #{tpu_custom_call.1} parent=1 // pred_check_branch
      %38 = sbr.rel (0) target = $region17
    $region16: #{tpu_custom_call.1} parent=1 // pred_region
      %39 = dma.done [#allocation4], 256
    $region17: #{tpu_custom_call.1} parent=1 // pred_fallthru
      _
    // Predicated region
    $region18: #{tpu_custom_call.1} parent=1 // pred_check
      _
    $region19: #{tpu_custom_call.1} parent=1 // pred_check_branch
      %41 = sbr.rel (0) target = $region21
    $region20: #{tpu_custom_call.1} parent=1 // pred_region
      %42 = dma.done [#allocation7], 512
    $region21: #{tpu_custom_call.1} parent=1 // pred_fallthru
      _
    %p43 = scmp.eq.s32.totalorder 0, 0
    // Predicated region
    $region22: #{tpu_custom_call.1} parent=1 // pred_check
      %p44 = pneg %p43
    $region23: #{tpu_custom_call.1} parent=1 // pred_check_branch
      %46 = sbr.rel (%p44) target = $region25
    $region24: #{tpu_custom_call.1} parent=1 // pred_region
      %vm47 = vcmask 785408
      %48 = vst.msk [vmem:[#allocation2] sm:$0xff] %vm47, 0.0
      %49 = vst.msk [vmem:[#allocation2 + $0x8] sm:$0xff] %vm47, 0.0
    $region25: #{tpu_custom_call.1} parent=1 // pred_fallthru
      _
    %v50 = vld [vmem:[#allocation2] sm:$0xff]
    %v51 = vld [vmem:[#allocation2 + $0x8] sm:$0xff]
    %v52 = vld [vmem:[#allocation3] sm:$0xff]
    %v53 = vld [vmem:[#allocation3 + $0x8] sm:$0xff]
    %v54 = vld [vmem:[#allocation6] sm:$0xff]
    %v55 = vld [vmem:[#allocation6 + $0x8] sm:$0xff]
    %v56 = vld [vmem:[#allocation6 + $0x10] sm:$0xff]
    %v57 = vld [vmem:[#allocation6 + $0x18] sm:$0xff]
    %vm58 = vcmask 261120
    %v60 = vsel %vm58, %v52, 0
    %v63 = vsel %vm58, %v53, 0
    %65 = vmatprep.subr.mxu0 0.0
    %66 = vmatpush1.msra.mxu0 0.0
    %67 = vmatprep.subr.mxu0 0.0
    %68 = vmatpush1.msra.mxu0 0.0
    %69 = vmatprep.subr.mxu0 0.0
    %70 = vmatpush1.msra.mxu0 0.0
    %71 = vmatprep.subr.mxu0 0.0
    %72 = vmatpush1.msra.mxu0 0.0
    %73 = vmatprep.subr.mxu0 0.0
    %74 = vmatpush1.msra.mxu0 0.0
    %75 = vmatprep.subr.mxu0 0.0
    %76 = vmatpush1.msra.mxu0 0.0
    %77 = vmatprep.subr.mxu0 0.0
    %78 = vmatpush1.msra.mxu0 0.0
    %79 = vmatprep.subr.mxu0 0.0
    %80 = vmatpush1.msra.mxu0 0.0
    %81 = vmatprep.subr.mxu0 0.0
    %82 = vmatpush1.msra.mxu0 0.0
    %83 = vmatprep.subr.mxu0 0.0
    %84 = vmatpush1.msra.mxu0 0.0
    %85 = vmatprep.subr.mxu0 0.0
    %86 = vmatpush1.msra.mxu0 0.0
    %87 = vmatprep.subr.mxu0 0.0
    %88 = vmatpush1.msra.mxu0 0.0
    %89 = vmatprep.subr.mxu0 0.0
    %90 = vmatpush1.msra.mxu0 %v57
    %91 = vmatprep.subr.mxu0 0.0
    %92 = vmatpush1.msra.mxu0 %v56
    %93 = vmatprep.subr.mxu0 0.0
    %94 = vmatpush1.msra.mxu0 %v55
    %95 = vmatprep.subr.mxu0 0.0
    %96 = vmatpush1.msra.mxu0 %v54
    %97 = vmatprep.subr.mxu0 0.0
    %98 = vmatpush2.msra.mxu0 0.0
    %99 = vmatprep.subr.mxu0 0.0
    %100 = vmatpush2.msra.mxu0 0.0
    %101 = vmatprep.subr.mxu0 0.0
    %102 = vmatpush2.msra.mxu0 0.0
    %103 = vmatprep.subr.mxu0 0.0
    %104 = vmatpush2.msra.mxu0 0.0
    %105 = vmatprep.subr.mxu0 0.0
    %106 = vmatpush2.msra.mxu0 0.0
    %107 = vmatprep.subr.mxu0 0.0
    %108 = vmatpush2.msra.mxu0 0.0
    %109 = vmatprep.subr.mxu0 0.0
    %110 = vmatpush2.msra.mxu0 0.0
    %111 = vmatprep.subr.mxu0 0.0
    %112 = vmatpush2.msra.mxu0 0.0
    %113 = vmatprep.subr.mxu0 0.0
    %114 = vmatpush2.msra.mxu0 0.0
    %115 = vmatprep.subr.mxu0 0.0
    %116 = vmatpush2.msra.mxu0 0.0
    %117 = vmatprep.subr.mxu0 0.0
    %118 = vmatpush2.msra.mxu0 0.0
    %119 = vmatprep.subr.mxu0 0.0
    %120 = vmatpush2.msra.mxu0 0.0
    %121 = vmatprep.subr.mxu0 0.0
    %122 = vmatpush2.msra.mxu0 0.0
    %123 = vmatprep.subr.mxu0 0.0
    %124 = vmatpush2.msra.mxu0 0.0
    %125 = vmatprep.subr.mxu0 0.0
    %126 = vmatpush2.msra.mxu0 0.0
    %127 = vmatprep.subr.mxu0 0.0
    %128 = vmatpush2.msra.mxu0 0.0
    %129 = vmatprep.mubr.f32.mxu0 0.0
    %130 = vmatmul.mubr.f32.gmra.mxu0 %v60
    %v131 = vpop.f32.mrf.mxu0
    %v132 = vadd.f32 0.0, %v131
    %v133 = vpop.f32.mrf.mxu0
    %134 = vmatprep.mubr.f32.mxu0 0.0
    %135 = vmatmul.mubr.f32.gmra.mxu0 %v63
    %v136 = vpop.f32.mrf.mxu0
    %v137 = vadd.f32 0.0, %v136
    %v138 = vpop.f32.mrf.mxu0
    %139 = vdwg.mxu0
    %v140 = vadd.f32 %v50, %v132
    %v141 = vadd.f32 %v51, %v137
    %vm142 = vcmask 785408
    %143 = vst.msk [vmem:[#allocation2] sm:$0xff] %vm142, %v140
    %144 = vst.msk [vmem:[#allocation2 + $0x8] sm:$0xff] %vm142, %v141
    // Predicated region
    $region26: #{tpu_custom_call.1} parent=1 // pred_check
      %p145 = pneg %p43
    $region27: #{tpu_custom_call.1} parent=1 // pred_check_branch
      %147 = sbr.rel (%p145) target = $region29
    $region28: #{tpu_custom_call.1} parent=1 // pred_region
      %v148 = vld [vmem:[#allocation2] sm:$0xff]
      %v149 = vld [vmem:[#allocation2 + $0x8] sm:$0xff]
      %v150 = vld [vmem:[%s2] sm:$0x1]
      %v152 = vlaneseq
      %v153 = vshrl.u32 %v152, 7
      %v154 = vsub.s32 0, %v153
      %v155 = vrot.slane %v150, %v154
      %v157 = vadd.f32 %v148, %v155
      %v158 = vadd.f32 %v149, %v155
      %159 = vst.msk [vmem:[#allocation8] sm:$0xff] %vm142, %v157
      %160 = vst.msk [vmem:[#allocation8 + $0x8] sm:$0xff] %vm142, %v158
    $region29: #{tpu_custom_call.1} parent=1 // pred_fallthru
      _
    // Predicated region
    $region30: #{tpu_custom_call.1} parent=1 // pred_check
      _
    $region31: #{tpu_custom_call.1} parent=1 // pred_check_branch
      %162 = sbr.rel (0) target = $region33
    $region32: #{tpu_custom_call.1} parent=1 // pred_region
      %s164 = ssub.s32 256, 256
      %165 = vsyncadd [#allocation5], %s164
      %s166 = sshll.u32 [#allocation8], 4
      %s167 = int_to_ptr.vmem [resolvable:$true] %s166
      %172 = dma.vmem_to_hbm [thread:$0]  %s167, 256, %s3, [#allocation5], 128, 128, 8
    $region33: #{tpu_custom_call.1} parent=1 // pred_fallthru
      _
    // Predicated region
    $region34: #{tpu_custom_call.1} parent=1 // pred_check
      _
    $region35: #{tpu_custom_call.1} parent=1 // pred_check_branch
      %174 = sbr.rel (0) target = $region37
    $region36: #{tpu_custom_call.1} parent=1 // pred_region
      %175 = dma.done [#allocation5], 256
    $region37: #{tpu_custom_call.1} parent=1 // pred_fallthru
      _
    %176 = vsyncpa [#allocation4], 1
    %177 = vsyncpa [#allocation7], 1
    %178 = vsyncpa [#allocation5], 1

</llo_original>
